<compile_context>
chip_gen: v5e
topology: v5e:2x2
jax: 0.10.0
libtpu: 0.0.40
codegen_flags: <defaults>
</compile_context>

<pallas_src>
import functools

import jax
import jax.numpy as jnp
from jax.experimental import pallas as pl
from jax.experimental.pallas import tpu as pltpu

_LANES = 128
_MAX_TILE_ROWS = 4096         # 4096 * 128 * 4 B = 2 MiB per f32 input tile
_FAST_PATH_MAX_N = 4096       # below this, fused XLA beats a pallas_call launch


def _cdiv(a, b):
    return -(-a // b)


_NUM_CORES_CACHE = None


def _num_tensorcores():
    """Best-effort TensorCore-per-chip count (2 on v7x, 1 on v5e/v6e)."""
    global _NUM_CORES_CACHE
    if _NUM_CORES_CACHE is not None:
        return _NUM_CORES_CACHE
    cores = 1
    try:
        info = pltpu.get_tpu_info()
        for name in ("num_cores", "tensorcore_count", "num_tensorcores",
                     "cores_per_chip", "core_count"):
            v = getattr(info, name, None)
            if v:
                cores = max(cores, int(v))
                break
    except Exception:
        pass
    if cores == 1:
        try:
            cores = max(cores, int(getattr(jax.devices()[0], "num_cores", 1) or 1))
        except Exception:
            pass
    _NUM_CORES_CACHE = cores
    return cores


def _bpr_loss_kernel(pos_ref, neg_ref, out_ref, acc_ref, *,
                     gamma, rows_valid, tile_rows, tiles_per_split, has_partial):
    # pos_ref / neg_ref : (tile_rows, 128) input tiles (native dtype).
    # out_ref           : (1, 1, 128) f32 per-core lane-wise partial sums.
    # acc_ref           : (8, 128) f32 VMEM accumulator.
    t = pl.program_id(1)
    groups = tile_rows // 8

    @pl.when(t == 0)
    def _():
        acc_ref[...] = jnp.zeros_like(acc_ref)

    d = pos_ref[...].astype(jnp.float32) - neg_ref[...].astype(jnp.float32)
    # sigmoid as a single transcendental (tanh), then one log: 2 EUP pushes/vreg.
    sig = 0.5 * jnp.tanh(0.5 * d) + 0.5
    val = -jnp.log(gamma + sig)        # matches torch: -log(gamma + sigmoid(.))

    if has_partial:
        tile_idx = pl.program_id(0) * tiles_per_split + t
        boundary_tile = rows_valid // tile_rows   # first tile touching the edge

        @pl.when(tile_idx >= boundary_tile)       # mask only the boundary tile
        def _():
            row = jax.lax.broadcasted_iota(jnp.int32, (tile_rows, _LANES), 0)
            grow = tile_idx * tile_rows + row
            masked = jnp.where(grow < rows_valid, val, 0.0)
            acc_ref[...] += masked.reshape(groups, 8, _LANES).sum(axis=0)

        @pl.when(tile_idx < boundary_tile)        # steady state: no mask ops
        def _():
            acc_ref[...] += val.reshape(groups, 8, _LANES).sum(axis=0)
    else:
        acc_ref[...] += val.reshape(groups, 8, _LANES).sum(axis=0)

    @pl.when(t == tiles_per_split - 1)
    def _():
        # Single (8,128)->(1,128) sublane reduce, deferred to the epilogue.
        out_ref[...] = jnp.sum(acc_ref[...], axis=0, keepdims=True).reshape(
            1, 1, _LANES)


def bpr_loss(pos_score, neg_score, gamma=1e-10):
    """BPR loss: -mean(log(gamma + sigmoid(pos_score - neg_score))). Scalar f32."""
    assert pos_score.shape == neg_score.shape
    (n,) = pos_score.shape
    gamma = float(gamma)

    def _fused_neg_log_sum(p, q):
        p = p.astype(jnp.float32)
        q = q.astype(jnp.float32)
        return -jnp.sum(jnp.log(gamma + jax.nn.sigmoid(p - q)))

    if n < _FAST_PATH_MAX_N:
        return _fused_neg_log_sum(pos_score, neg_score) * (1.0 / n)

    # Split off the <=127-element tail; the bulk (a multiple of 128) goes to the
    # kernel with no host-side padding.
    n_main = (n // _LANES) * _LANES
    tail = n - n_main
    rem = _fused_neg_log_sum(pos_score[n_main:], neg_score[n_main:]) if tail else 0.0

    pos, neg = pos_score, neg_score
    if tail:
        # TODO(synk): the prefix slice may copy when n % 128 != 0; a
        # memory_space=pl.ANY + manual make_async_copy variant would avoid
        # touching the whole array.  n % 128 == 0 is the zero-copy fast case.
        pos = pos[:n_main]
        neg = neg[:n_main]
    rows = n_main // _LANES                       # >= 32 on this path
    pos = pos.reshape(rows, _LANES)               # free bitcast (same layout)
    neg = neg.reshape(rows, _LANES)

    # Tile rows: multiple of 16 (bf16 sublane packing), capped at 2 MiB/tile.
    tile_rows = min(_MAX_TILE_ROWS, (rows // 16) * 16)
    total_tiles = _cdiv(rows, tile_rows)
    has_partial = (rows % tile_rows) != 0

    # Core split only on multi-TC parts with enough (even) tiles per core, so no
    # grid block ever starts fully out of bounds and pipelines reach steady state.
    n_splits = 1
    if _num_tensorcores() > 1 and total_tiles >= 8 and total_tiles % 2 == 0:
        n_splits = 2
    tiles_per_split = total_tiles // n_splits

    kernel = functools.partial(
        _bpr_loss_kernel,
        gamma=gamma, rows_valid=rows, tile_rows=tile_rows,
        tiles_per_split=tiles_per_split, has_partial=has_partial)

    in_map = lambda c, t: (c * tiles_per_split + t, 0)
    partials = pl.pallas_call(
        kernel,
        out_shape=jax.ShapeDtypeStruct((n_splits, 1, _LANES), jnp.float32),
        grid_spec=pltpu.PrefetchScalarGridSpec(
            num_scalar_prefetch=0,
            grid=(n_splits, tiles_per_split),
            in_specs=[pl.BlockSpec((tile_rows, _LANES), in_map),
                      pl.BlockSpec((tile_rows, _LANES), in_map)],
            out_specs=pl.BlockSpec((1, 1, _LANES), lambda c, t: (c, 0, 0)),
            scratch_shapes=[pltpu.VMEM((8, _LANES), jnp.float32)]),
        compiler_params=pltpu.CompilerParams(
            dimension_semantics=("parallel", "arbitrary")),
    )(pos, neg)

    return (jnp.sum(partials) + rem) * (1.0 / n)


if __name__ == "__main__":
    key = jax.random.PRNGKey(0)

    # n=8       : tiny fused fast path (module's documented (N,) usage).
    # n=12345   : single-tile Pallas path + 57-element jnp tail.
    # n=300001  : two tiles, masked boundary tile, 97-element jnp tail.
    # n=1049216 : n % 128 == 0 (zero-copy path), 3 tiles, masked overrun block.
    for n in (8, 12345, 300001, 1049216):
        k1, k2 = jax.random.split(jax.random.fold_in(key, n))
        pos_score = jax.random.normal(k1, (n,), dtype=jnp.float32)
        neg_score = jax.random.normal(k2, (n,), dtype=jnp.float32)

        loss = bpr_loss(pos_score, neg_score)
        jax.block_until_ready(loss)

        ref = -jnp.mean(jnp.log(1e-10 + jax.nn.sigmoid(pos_score - neg_score)))
        assert jnp.allclose(loss, ref, atol=1e-4, rtol=1e-5), (n, loss, ref)

    print("KERNEL_OK")
</pallas_src>

<mosaic_0001>
module attributes {stable_mosaic.version = 11 : i64} {
  func.func @_bpr_loss_kernel(%arg0: i32, %arg1: i32, %arg2: memref<96x128xf32, #tpu.memory_space<vmem>>, %arg3: memref<96x128xf32, #tpu.memory_space<vmem>>, %arg4: memref<1x1x128xf32, #tpu.memory_space<vmem>>, %arg5: memref<8x128xf32, #tpu.memory_space<vmem>>) attributes {dimension_semantics = [#tpu.dimension_semantics<parallel>, #tpu.dimension_semantics<arbitrary>], iteration_bounds = array<i64: 1, 1>, scalar_prefetch = 0 : i64, scratch_operands = 1 : i64, tpu.core_type = #tpu.core_type<tc>, window_params = [{transform_indices = @transform_0, window_bounds = array<i64: 96, 128>}, {transform_indices = @transform_1, window_bounds = array<i64: 96, 128>}, {transform_indices = @transform_2, window_bounds = array<i64: 1, 1, 128>}]} {
    %c0_i32 = arith.constant 0 : i32
    %0 = arith.cmpi eq, %arg1, %c0_i32 : i32
    %1 = arith.extui %0 : i1 to i32
    %c0_i32_0 = arith.constant 0 : i32
    %2 = arith.cmpi ne, %1, %c0_i32_0 : i32
    scf.if %2 {
      %cst_15 = arith.constant 0.000000e+00 : f32
      %26 = vector.broadcast %cst_15 : f32 to vector<8x128xf32>
      %c0_16 = arith.constant 0 : index
      %c0_17 = arith.constant 0 : index
      %27 = vector.load %arg5[%c0_16, %c0_17] : memref<8x128xf32, #tpu.memory_space<vmem>>, vector<8x128xf32>
      tpu.vector_store %arg5[%c0_16, %c0_17], %26 {strides = array<i32>} : memref<8x128xf32, #tpu.memory_space<vmem>>, vector<8x128xf32>,
    } else {
    }
    %c0 = arith.constant 0 : index
    %c0_1 = arith.constant 0 : index
    %3 = vector.load %arg2[%c0, %c0_1] : memref<96x128xf32, #tpu.memory_space<vmem>>, vector<96x128xf32>
    %c0_2 = arith.constant 0 : index
    %c0_3 = arith.constant 0 : index
    %4 = vector.load %arg3[%c0_2, %c0_3] : memref<96x128xf32, #tpu.memory_space<vmem>>, vector<96x128xf32>
    %5 = arith.subf %3, %4 : vector<96x128xf32>
    %cst = arith.constant 5.000000e-01 : f32
    %6 = vector.broadcast %cst : f32 to vector<96x128xf32>
    %7 = arith.mulf %6, %5 : vector<96x128xf32>
    %8 = math.tanh %7 : vector<96x128xf32>
    %cst_4 = arith.constant 5.000000e-01 : f32
    %9 = vector.broadcast %cst_4 : f32 to vector<96x128xf32>
    %10 = arith.mulf %9, %8 : vector<96x128xf32>
    %cst_5 = arith.constant 5.000000e-01 : f32
    %11 = vector.broadcast %cst_5 : f32 to vector<96x128xf32>
    %12 = arith.addf %10, %11 : vector<96x128xf32>
    %cst_6 = arith.constant 1.000000e-10 : f32
    %13 = vector.broadcast %cst_6 : f32 to vector<96x128xf32>
    %14 = arith.addf %13, %12 : vector<96x128xf32>
    %15 = math.log %14 : vector<96x128xf32>
    %cst_7 = arith.constant 0.000000e+00 : f32
    %16 = vector.broadcast %cst_7 : f32 to vector<96x128xf32>
    %17 = arith.subf %16, %15 : vector<96x128xf32>
    %c0_8 = arith.constant 0 : index
    %c0_9 = arith.constant 0 : index
    %18 = vector.load %arg5[%c0_8, %c0_9] : memref<8x128xf32, #tpu.memory_space<vmem>>, vector<8x128xf32>
    %19 = vector.shape_cast %17 : vector<96x128xf32> to vector<12x8x128xf32>
    %cst_10 = arith.constant dense<0.000000e+00> : vector<8x128xf32>
    %20 = vector.multi_reduction <add>, %19, %cst_10 [0] : vector<12x8x128xf32> to vector<8x128xf32>
    %21 = arith.addf %18, %20 : vector<8x128xf32>
    %c0_11 = arith.constant 0 : index
    %c0_12 = arith.constant 0 : index
    %22 = vector.load %arg5[%c0_11, %c0_12] : memref<8x128xf32, #tpu.memory_space<vmem>>, vector<8x128xf32>
    tpu.vector_store %arg5[%c0_11, %c0_12], %21 {strides = array<i32>} : memref<8x128xf32, #tpu.memory_space<vmem>>, vector<8x128xf32>,
    %c0_i32_13 = arith.constant 0 : i32
    %23 = arith.cmpi eq, %arg1, %c0_i32_13 : i32
    %24 = arith.extui %23 : i1 to i32
    %c0_i32_14 = arith.constant 0 : i32
    %25 = arith.cmpi ne, %24, %c0_i32_14 : i32
    scf.if %25 {
      %c0_15 = arith.constant 0 : index
      %c0_16 = arith.constant 0 : index
      %26 = vector.load %arg5[%c0_15, %c0_16] : memref<8x128xf32, #tpu.memory_space<vmem>>, vector<8x128xf32>
      %cst_17 = arith.constant dense<0.000000e+00> : vector<128xf32>
      %27 = vector.multi_reduction <add>, %26, %cst_17 [0] : vector<8x128xf32> to vector<128xf32>
      %28 = vector.shape_cast %27 : vector<128xf32> to vector<1x128xf32>
      %29 = vector.shape_cast %28 : vector<1x128xf32> to vector<1x1x128xf32>
      %c0_18 = arith.constant 0 : index
      %c0_19 = arith.constant 0 : index
      %c0_20 = arith.constant 0 : index
      %30 = vector.load %arg4[%c0_18, %c0_19, %c0_20] : memref<1x1x128xf32, #tpu.memory_space<vmem>>, vector<1x1x128xf32>
      tpu.vector_store %arg4[%c0_18, %c0_19, %c0_20], %29 {strides = array<i32>} : memref<1x1x128xf32, #tpu.memory_space<vmem>>, vector<1x1x128xf32>,
    } else {
    }
    return
  }
  func.func @transform_0(%arg0: i32, %arg1: i32) -> (i32, i32) {
    %c1_i32 = arith.constant 1 : i32
    %0 = arith.muli %arg0, %c1_i32 : i32
    %1 = arith.addi %0, %arg1 : i32
    %c0_i32 = arith.constant 0 : i32
    %c0_i32_0 = arith.constant 0 : i32
    return %1, %c0_i32 : i32, i32
  }
  func.func @transform_1(%arg0: i32, %arg1: i32) -> (i32, i32) {
    %c1_i32 = arith.constant 1 : i32
    %0 = arith.muli %arg0, %c1_i32 : i32
    %1 = arith.addi %0, %arg1 : i32
    %c0_i32 = arith.constant 0 : i32
    %c0_i32_0 = arith.constant 0 : i32
    return %1, %c0_i32 : i32, i32
  }
  func.func @transform_2(%arg0: i32, %arg1: i32) -> (i32, i32, i32) {
    %c0_i32 = arith.constant 0 : i32
    %c0_i32_0 = arith.constant 0 : i32
    %c0_i32_1 = arith.constant 0 : i32
    return %arg0, %c0_i32, %c0_i32_0 : i32, i32, i32
  }
}

</mosaic_0001>

<llo_original>
// kernel: tpu_custom_call.1
$region0: #{tpu_custom_call.1}
  #allocation0 [shape = 'u32[]', space=smem, size = 0x4, offset = 0x4, fixed_abs, tag = 'smem constant byte address 0x4 - core index']
  #allocation1 [shape = 'u32[72,128]{1,0:T(1,128)}', space=vmem, size = 0x9000, scoped, tag = 'internal scratch']
  #allocation2 [shape = 'f32[8,128]{1,0:T(8,128)}', space=vmem, size = 0x1000, scoped, tag = 'scratch operand']
  %s0 = inlined_call_operand.hbm [shape: f32[96,128], index: 0, kind: input, shape index: {}]
  %s1 = inlined_call_operand.hbm [shape: f32[96,128], index: 1, kind: input, shape index: {}]
  %s2 = inlined_call_operand.hbm [shape: f32[1,1,128], index: 2, kind: output, shape index: {}]
  %s3 = sld [smem:[#allocation0]]
  $region34: #{tpu_custom_call.1} parent=0
    _
  %s5 = ssub.s32 1, %s3
  %s6 = scalar_select 0, %s5, %s3
  $region1: #{tpu_custom_call.1} parent=0
    #allocation3 [shape = 'u8[49152]{0}', space=vmem, size = 0xc000, scoped, tag = 'input window, operand 0, single buffered']
    #allocation4 [shape = 's32[1]{0}', space=sflag, size = 0x4, scoped, tag = 'scoped memory for tpu_custom_call.1']
    #allocation5 [shape = 's32[1]{0}', space=sflag, size = 0x4, scoped, tag = 'scoped memory for tpu_custom_call.1']
    #allocation6 [shape = 'u8[49152]{0}', space=vmem, size = 0xc000, scoped, tag = 'input window, operand 1, single buffered']
    #allocation7 [shape = 's32[1]{0}', space=sflag, size = 0x4, scoped, tag = 'scoped memory for tpu_custom_call.1']
    #allocation8 [shape = 'u8[512]{0}', space=vmem, size = 0x400, scoped, tag = 'output window, operand 0, single buffered']
    %7 = vsyncpa [#allocation4], 0
    %8 = vsyncpa [#allocation7], 0
    %9 = vsyncpa [#allocation5], 0
    // Predicated region
    $region2: #{tpu_custom_call.1} parent=1 // pred_check
      _
    $region3: #{tpu_custom_call.1} parent=1 // pred_check_branch
      %11 = sbr.rel (0) target = $region5
    $region4: #{tpu_custom_call.1} parent=1 // pred_region
      %s12 = sadd.s32 0, 0
      %s13 = smul.u32 12, %s12
      %15 = vsyncadd [#allocation4], 0
      %s16 = smul.addr %s13, 8
      %s17 = scalar_lea.hbm %s0, %s16
      %s18 = sshll.u32 %s17, 4
      %s19 = int_to_ptr.hbm [resolvable:$true] %s18
      %s20 = sshll.u32 [#allocation3], 4
      %s21 = int_to_ptr.vmem [resolvable:$true] %s20
      %26 = dma.hbm_to_vmem [thread:$0]  %s19, 1536, %s21, [#allocation4], 128, 128, 8
    $region5: #{tpu_custom_call.1} parent=1 // pred_fallthru
      _
    // Predicated region
    $region6: #{tpu_custom_call.1} parent=1 // pred_check
      _
    $region7: #{tpu_custom_call.1} parent=1 // pred_check_branch
      %28 = sbr.rel (0) target = $region9
    $region8: #{tpu_custom_call.1} parent=1 // pred_region
      %s29 = sadd.s32 0, 0
      %s30 = smul.u32 12, %s29
      %32 = vsyncadd [#allocation7], 0
      %s33 = smul.addr %s30, 8
      %s34 = scalar_lea.hbm %s1, %s33
      %s35 = sshll.u32 %s34, 4
      %s36 = int_to_ptr.hbm [resolvable:$true] %s35
      %s37 = sshll.u32 [#allocation6], 4
      %s38 = int_to_ptr.vmem [resolvable:$true] %s37
      %43 = dma.hbm_to_vmem [thread:$0]  %s36, 1536, %s38, [#allocation7], 128, 128, 8
    $region9: #{tpu_custom_call.1} parent=1 // pred_fallthru
      _
    // Predicated region
    $region10: #{tpu_custom_call.1} parent=1 // pred_check
      _
    $region11: #{tpu_custom_call.1} parent=1 // pred_check_branch
      %45 = sbr.rel (0) target = $region13
    $region12: #{tpu_custom_call.1} parent=1 // pred_region
      %47 = dma.done [#allocation4], 1536
    $region13: #{tpu_custom_call.1} parent=1 // pred_fallthru
      _
    // Predicated region
    $region14: #{tpu_custom_call.1} parent=1 // pred_check
      _
    $region15: #{tpu_custom_call.1} parent=1 // pred_check_branch
      %49 = sbr.rel (0) target = $region17
    $region16: #{tpu_custom_call.1} parent=1 // pred_region
      %51 = dma.done [#allocation7], 1536
    $region17: #{tpu_custom_call.1} parent=1 // pred_fallthru
      _
    %s52 = sadd.s32 0, 0
    %s53 = smul.u32 12, %s52
    %s54 = sadd.s32 0, 0
    %s55 = smul.u32 12, %s54
    %p56 = scmp.eq.s32.totalorder 0, 0
    // Predicated region
    $region18: #{tpu_custom_call.1} parent=1 // pred_check
      %p57 = pneg %p56
    $region19: #{tpu_custom_call.1} parent=1 // pred_check_branch
      %59 = sbr.rel (%p57) target = $region21
    $region20: #{tpu_custom_call.1} parent=1 // pred_region
      %60 = vst [vmem:[#allocation2] sm:$0xff] 0.0
    $region21: #{tpu_custom_call.1} parent=1 // pred_fallthru
      _
    %v61 = vld [vmem:[#allocation3] sm:$0xff]
    %v62 = vld [vmem:[#allocation3 + $0x8] sm:$0xff]
    %v63 = vld [vmem:[#allocation3 + $0x10] sm:$0xff]
    %v64 = vld [vmem:[#allocation3 + $0x18] sm:$0xff]
    %v65 = vld [vmem:[#allocation3 + $0x20] sm:$0xff]
    %v66 = vld [vmem:[#allocation3 + $0x28] sm:$0xff]
    %v67 = vld [vmem:[#allocation3 + $0x30] sm:$0xff]
    %v68 = vld [vmem:[#allocation3 + $0x38] sm:$0xff]
    %v69 = vld [vmem:[#allocation3 + $0x40] sm:$0xff]
    %v70 = vld [vmem:[#allocation3 + $0x48] sm:$0xff]
    %v71 = vld [vmem:[#allocation3 + $0x50] sm:$0xff]
    %v72 = vld [vmem:[#allocation3 + $0x58] sm:$0xff]
    %v73 = vld [vmem:[#allocation6] sm:$0xff]
    %v74 = vld [vmem:[#allocation6 + $0x8] sm:$0xff]
    %v75 = vld [vmem:[#allocation6 + $0x10] sm:$0xff]
    %v76 = vld [vmem:[#allocation6 + $0x18] sm:$0xff]
    %v77 = vld [vmem:[#allocation6 + $0x20] sm:$0xff]
    %v78 = vld [vmem:[#allocation6 + $0x28] sm:$0xff]
    %v79 = vld [vmem:[#allocation6 + $0x30] sm:$0xff]
    %v80 = vld [vmem:[#allocation6 + $0x38] sm:$0xff]
    %v81 = vld [vmem:[#allocation6 + $0x40] sm:$0xff]
    %v82 = vld [vmem:[#allocation6 + $0x48] sm:$0xff]
    %v83 = vld [vmem:[#allocation6 + $0x50] sm:$0xff]
    %v84 = vld [vmem:[#allocation6 + $0x58] sm:$0xff]
    %v85 = vsub.f32 %v61, %v73
    %v86 = vsub.f32 %v62, %v74
    %v87 = vsub.f32 %v63, %v75
    %v88 = vsub.f32 %v64, %v76
    %v89 = vsub.f32 %v65, %v77
    %v90 = vsub.f32 %v66, %v78
    %v91 = vsub.f32 %v67, %v79
    %v92 = vsub.f32 %v68, %v80
    %v93 = vsub.f32 %v69, %v81
    %v94 = vsub.f32 %v70, %v82
    %v95 = vsub.f32 %v71, %v83
    %v96 = vsub.f32 %v72, %v84
    %v97 = vmul.f32 %v85, 0.5
    %v98 = vmul.f32 %v86, 0.5
    %v99 = vmul.f32 %v87, 0.5
    %v100 = vmul.f32 %v88, 0.5
    %v101 = vmul.f32 %v89, 0.5
    %v102 = vmul.f32 %v90, 0.5
    %v103 = vmul.f32 %v91, 0.5
    %v104 = vmul.f32 %v92, 0.5
    %v105 = vmul.f32 %v93, 0.5
    %v106 = vmul.f32 %v94, 0.5
    %v107 = vmul.f32 %v95, 0.5
    %v108 = vmul.f32 %v96, 0.5
    %v109 = vtanh.pop %v97
    %v110 = vtanh.pop %v98
    %v111 = vtanh.pop %v99
    %v112 = vtanh.pop %v100
    %v113 = vtanh.pop %v101
    %v114 = vtanh.pop %v102
    %v115 = vtanh.pop %v103
    %v116 = vtanh.pop %v104
    %v117 = vtanh.pop %v105
    %v118 = vtanh.pop %v106
    %v119 = vtanh.pop %v107
    %v120 = vtanh.pop %v108
    %v121 = vmul.f32 %v109, 0.5
    %v122 = vmul.f32 %v110, 0.5
    %v123 = vmul.f32 %v111, 0.5
    %v124 = vmul.f32 %v112, 0.5
    %v125 = vmul.f32 %v113, 0.5
    %v126 = vmul.f32 %v114, 0.5
    %v127 = vmul.f32 %v115, 0.5
    %v128 = vmul.f32 %v116, 0.5
    %v129 = vmul.f32 %v117, 0.5
    %v130 = vmul.f32 %v118, 0.5
    %v131 = vmul.f32 %v119, 0.5
    %v132 = vmul.f32 %v120, 0.5
    %v133 = vadd.f32 %v121, 0.5
    %v134 = vadd.f32 %v122, 0.5
    %v135 = vadd.f32 %v123, 0.5
    %v136 = vadd.f32 %v124, 0.5
    %v137 = vadd.f32 %v125, 0.5
    %v138 = vadd.f32 %v126, 0.5
    %v139 = vadd.f32 %v127, 0.5
    %v140 = vadd.f32 %v128, 0.5
    %v141 = vadd.f32 %v129, 0.5
    %v142 = vadd.f32 %v130, 0.5
    %v143 = vadd.f32 %v131, 0.5
    %v144 = vadd.f32 %v132, 0.5
    %v145 = vadd.f32 %v133, 1e-10
    %v146 = vadd.f32 %v134, 1e-10
    %v147 = vadd.f32 %v135, 1e-10
    %v148 = vadd.f32 %v136, 1e-10
    %v149 = vadd.f32 %v137, 1e-10
    %v150 = vadd.f32 %v138, 1e-10
    %v151 = vadd.f32 %v139, 1e-10
    %v152 = vadd.f32 %v140, 1e-10
    %v153 = vadd.f32 %v141, 1e-10
    %v154 = vadd.f32 %v142, 1e-10
    %v155 = vadd.f32 %v143, 1e-10
    %v156 = vadd.f32 %v144, 1e-10
    %v157 = vlog2.pop %v145
    %v158 = vmul.f32 %v157, 0.6931472
    %v159 = vlog2.pop %v146
    %v160 = vmul.f32 %v159, 0.6931472
    %v161 = vlog2.pop %v147
    %v162 = vmul.f32 %v161, 0.6931472
    %v163 = vlog2.pop %v148
    %v164 = vmul.f32 %v163, 0.6931472
    %v165 = vlog2.pop %v149
    %v166 = vmul.f32 %v165, 0.6931472
    %v167 = vlog2.pop %v150
    %v168 = vmul.f32 %v167, 0.6931472
    %v169 = vlog2.pop %v151
    %v170 = vmul.f32 %v169, 0.6931472
    %v171 = vlog2.pop %v152
    %v172 = vmul.f32 %v171, 0.6931472
    %v173 = vlog2.pop %v153
    %v174 = vmul.f32 %v173, 0.6931472
    %v175 = vlog2.pop %v154
    %v176 = vmul.f32 %v175, 0.6931472
    %v177 = vlog2.pop %v155
    %v178 = vmul.f32 %v177, 0.6931472
    %v179 = vlog2.pop %v156
    %v180 = vmul.f32 %v179, 0.6931472
    %v181 = vsub.f32 0.0, %v158
    %v182 = vsub.f32 0.0, %v160
    %v183 = vsub.f32 0.0, %v162
    %v184 = vsub.f32 0.0, %v164
    %v185 = vsub.f32 0.0, %v166
    %v186 = vsub.f32 0.0, %v168
    %v187 = vsub.f32 0.0, %v170
    %v188 = vsub.f32 0.0, %v172
    %v189 = vsub.f32 0.0, %v174
    %v190 = vsub.f32 0.0, %v176
    %v191 = vsub.f32 0.0, %v178
    %v192 = vsub.f32 0.0, %v180
    %v193 = vld [vmem:[#allocation2] sm:$0xff]
    %v194 = vadd.f32 %v181, %v182
    %v195 = vadd.f32 %v194, %v183
    %v196 = vadd.f32 %v195, %v184
    %v197 = vadd.f32 %v196, %v185
    %v198 = vadd.f32 %v197, %v186
    %v199 = vadd.f32 %v198, %v187
    %v200 = vadd.f32 %v199, %v188
    %v201 = vadd.f32 %v200, %v189
    %v202 = vadd.f32 %v201, %v190
    %v203 = vadd.f32 %v202, %v191
    %v204 = vadd.f32 %v203, %v192
    %v205 = vadd.f32 %v193, %v204
    %206 = vst [vmem:[#allocation2] sm:$0xff] %v205
    // Predicated region
    $region22: #{tpu_custom_call.1} parent=1 // pred_check
      %p207 = pneg %p56
    $region23: #{tpu_custom_call.1} parent=1 // pred_check_branch
      %209 = sbr.rel (%p207) target = $region25
    $region24: #{tpu_custom_call.1} parent=1 // pred_region
      %v210 = vld [vmem:[#allocation2] sm:$0xff]
      %v211 = vrot.slane %v210, 4
      %v212 = vadd.f32 %v210, %v211
      %v213 = vrot.slane %v212, 2
      %v214 = vadd.f32 %v212, %v213
      %v215 = vrot.slane %v214, 1
      %v216 = vadd.f32 %v214, %v215
      %217 = vst [vmem:[#allocation8] sm:$0x1] %v216
    $region25: #{tpu_custom_call.1} parent=1 // pred_fallthru
      _
    // Predicated region
    $region26: #{tpu_custom_call.1} parent=1 // pred_check
      _
    $region27: #{tpu_custom_call.1} parent=1 // pred_check_branch
      %219 = sbr.rel (0) target = $region29
    $region28: #{tpu_custom_call.1} parent=1 // pred_region
      %221 = vsyncadd [#allocation5], 0
      %s223 = sshll.u32 [#allocation8], 4
      %s224 = int_to_ptr.vmem [resolvable:$true] %s223
      %s225 = sshll.u32 %s2, 4
      %s226 = int_to_ptr.hbm [resolvable:$true] %s225
      %228 = dma.vmem_to_hbm [thread:$0]  %s224, 16, %s226, [#allocation5]
    $region29: #{tpu_custom_call.1} parent=1 // pred_fallthru
      _
    // Predicated region
    $region30: #{tpu_custom_call.1} parent=1 // pred_check
      _
    $region31: #{tpu_custom_call.1} parent=1 // pred_check_branch
      %230 = sbr.rel (0) target = $region33
    $region32: #{tpu_custom_call.1} parent=1 // pred_region
      %232 = dma.done [#allocation5], 16
    $region33: #{tpu_custom_call.1} parent=1 // pred_fallthru
      _
    %233 = vsyncpa [#allocation4], 1
    %234 = vsyncpa [#allocation7], 1
    %235 = vsyncpa [#allocation5], 1

</llo_original>
